<compile_context>
chip_gen: v5e
topology: v5e:2x2
jax: 0.10.0
libtpu: 0.0.40
codegen_flags: <defaults>
</compile_context>

<pallas_src>
import functools

import jax
import jax.numpy as jnp
from jax import lax
from jax.experimental import pallas as pl
from jax.experimental.pallas import tpu as pltpu


def bblock_kernel(x_ref, w_ref, b_ref, out_ref, *, res_scale):
    # x_ref  : (1, H, W*Cin)        activation slab, one batch element
    # w_ref  : (K, W*Cin, W*Cout)   banded weights (kw + channel taps folded in)
    # b_ref  : (1, W*Cout)          bias, tiled across W
    # out_ref: (1, H, W*Cout)
    _, H, WC = x_ref.shape
    K = w_ref.shape[0]
    half = K // 2
    cdt = w_ref.dtype                      # MXU operand dtype (f32 or bf16)

    xc = x_ref[0].astype(cdt)              # (H, W*Cin)
    acc = jnp.zeros(out_ref.shape[1:], jnp.float32)   # (H, W*Cout) f32 accum

    for kh in range(K):                    # 3 deep matmuls, accumulate in f32
        dh = kh - half
        if dh < 0:      # rows shifted down: row h reads x[h+dh], zeros on top
            shifted = jnp.concatenate(
                [jnp.zeros((-dh, WC), cdt), xc[:H + dh, :]], axis=0)
        elif dh > 0:    # rows shifted up: zeros at the bottom
            shifted = jnp.concatenate(
                [xc[dh:, :], jnp.zeros((dh, WC), cdt)], axis=0)
        else:
            shifted = xc
        acc = acc + jnp.dot(shifted, w_ref[kh],
                            preferred_element_type=jnp.float32)

    y = jnp.maximum(acc + b_ref[...], 0.0) * res_scale    # bias + ReLU + scale
    out_ref[0] = y.astype(out_ref.dtype)


def _banded_weights(w, W):
    """(Cout, Cin, K, K) PyTorch weights -> (K, W*Cin, W*Cout) banded matrices.

    banded[kh, wp*Cin + c, wo*Cout + d] = w[d, c, kh, kw] where kw = wp-wo+K//2,
    zero outside the band (which also realizes the zero 'same' padding along W).
    """
    Cout, Cin, K, _ = w.shape
    wk = jnp.transpose(w, (2, 3, 1, 0))                  # (K, K, Cin, Cout)
    wp = jnp.arange(W)[:, None]
    wo = jnp.arange(W)[None, :]
    kw_idx = wp - wo + K // 2                            # (W, W)
    valid = (kw_idx >= 0) & (kw_idx < K)
    kw_safe = jnp.clip(kw_idx, 0, K - 1)
    blocks = wk[:, kw_safe] * valid[None, :, :, None, None]   # (K, W, W, Cin, Cout)
    return blocks.transpose(0, 1, 3, 2, 4).reshape(K, W * Cin, W * Cout)


def bblock_pallas(x_nchw, w, b, res_scale=1.0, *, mxu_dtype=None):
    """x_nchw: (B, Cin, H, W); w: (Cout, Cin, K, K) PyTorch OIHW; b: (Cout,)."""
    B, Cin, H, W = x_nchw.shape
    Cout, Cin2, K, _ = w.shape
    assert Cin2 == Cin
    if mxu_dtype is None:   # bf16 operands only if the caller already runs bf16
        mxu_dtype = jnp.bfloat16 if x_nchw.dtype == jnp.bfloat16 else jnp.float32

    # Layout plumbing (one-time / boundary): NCHW -> lane-dense (B, H, W*Cin).
    x2d = jnp.transpose(x_nchw, (0, 2, 3, 1)).reshape(B, H, W * Cin)
    w_banded = _banded_weights(w, W).astype(mxu_dtype)       # cast hoisted here
    b_tiled = jnp.tile(b.reshape(1, Cout), (1, W)).astype(jnp.float32)  # (1, W*Cout)

    kernel = functools.partial(bblock_kernel, res_scale=float(res_scale))

    out2d = pl.pallas_call(
        kernel,
        out_shape=jax.ShapeDtypeStruct((B, H, W * Cout), x_nchw.dtype),
        grid_spec=pltpu.PrefetchScalarGridSpec(
            num_scalar_prefetch=0,
            grid=(B,),
            in_specs=[
                pl.BlockSpec((1, H, W * Cin), lambda bb: (bb, 0, 0)),          # x
                pl.BlockSpec((K, W * Cin, W * Cout), lambda bb: (0, 0, 0)),    # w
                pl.BlockSpec((1, W * Cout), lambda bb: (0, 0)),                # b
            ],
            out_specs=pl.BlockSpec((1, H, W * Cout), lambda bb: (bb, 0, 0)),
        ),
        compiler_params=pltpu.CompilerParams(
            dimension_semantics=("parallel",)),                # v7x megacore
    )(x2d, w_banded, b_tiled)

    return out2d.reshape(B, H, W, Cout).transpose(0, 3, 1, 2)  # back to NCHW


def bblock_ref(x, w, b, res_scale):
    """Pure-JAX reference (NCHW, matches PyTorch Conv2d padding=k//2 + ReLU)."""
    dn = lax.conv_dimension_numbers(x.shape, w.shape, ('NCHW', 'OIHW', 'NCHW'))
    y = lax.conv_general_dilated(x, w, (1, 1), 'SAME', dimension_numbers=dn)
    y = y + b.reshape(1, -1, 1, 1)
    y = jnp.maximum(y, 0.0)
    return y * res_scale


if __name__ == "__main__":
    B, Cin, Cout, H, W, K = 2, 4, 4, 16, 16, 3
    res_scale = 1.0

    key = jax.random.PRNGKey(0)
    kx, kw, kb = jax.random.split(key, 3)
    x = jax.random.normal(kx, (B, Cin, H, W), dtype=jnp.float32)
    w = jax.random.normal(kw, (Cout, Cin, K, K), dtype=jnp.float32) * 0.1
    b = jax.random.normal(kb, (Cout,), dtype=jnp.float32) * 0.1

    ref = bblock_ref(x, w, b, res_scale)

    # f32 MXU path (exact vs. reference).
    out = jax.block_until_ready(bblock_pallas(x, w, b, res_scale))
    assert out.shape == (B, Cout, H, W)
    assert jnp.allclose(out, ref, atol=1e-4, rtol=1e-4), (
        f"max abs err {jnp.max(jnp.abs(out - ref))}")

    # bf16-operand / f32-accumulate MXU fast path (v6e/v7x feedback item).
    out_bf16 = jax.block_until_ready(
        bblock_pallas(x, w, b, res_scale, mxu_dtype=jnp.bfloat16))
    assert jnp.allclose(out_bf16, ref, atol=2e-2, rtol=2e-2), (
        f"bf16 max abs err {jnp.max(jnp.abs(out_bf16 - ref))}")

    print("KERNEL_OK")
</pallas_src>

<mosaic_0001>
module attributes {stable_mosaic.version = 11 : i64} {
  func.func @bblock_kernel(%arg0: i32, %arg1: memref<1x16x64xf32, #tpu.memory_space<vmem>>, %arg2: memref<3x64x64xf32, #tpu.memory_space<vmem>>, %arg3: memref<1x64xf32, #tpu.memory_space<vmem>>, %arg4: memref<1x16x64xf32, #tpu.memory_space<vmem>>) attributes {dimension_semantics = [#tpu.dimension_semantics<parallel>], iteration_bounds = array<i64: 2>, scalar_prefetch = 0 : i64, scratch_operands = 0 : i64, tpu.core_type = #tpu.core_type<tc>, window_params = [{transform_indices = @transform_0, window_bounds = array<i64: 1, 16, 64>}, {pipeline_mode = #tpu.pipeline_mode<synchronous>, transform_indices = @transform_1, window_bounds = array<i64: 3, 64, 64>}, {pipeline_mode = #tpu.pipeline_mode<synchronous>, transform_indices = @transform_2, window_bounds = array<i64: 1, 64>}, {transform_indices = @transform_3, window_bounds = array<i64: 1, 16, 64>}]} {
    %c0 = arith.constant 0 : index
    %c0_0 = arith.constant 0 : index
    %c0_1 = arith.constant 0 : index
    %0 = vector.load %arg1[%c0, %c0_0, %c0_1] : memref<1x16x64xf32, #tpu.memory_space<vmem>>, vector<1x16x64xf32>
    %1 = vector.shape_cast %0 : vector<1x16x64xf32> to vector<16x64xf32>
    %cst = arith.constant 0.000000e+00 : f32
    %2 = vector.broadcast %cst : f32 to vector<16x64xf32>
    %cst_2 = arith.constant 0.000000e+00 : f32
    %3 = vector.broadcast %cst_2 : f32 to vector<1x64xf32>
    %4 = vector.extract_strided_slice %1 {offsets = [0, 0], sizes = [15, 64], strides = [1, 1]} : vector<16x64xf32> to vector<15x64xf32>
    %5 = tpu.concatenate %3, %4 in 0 : vector<1x64xf32>, vector<15x64xf32> -> vector<16x64xf32>
    %c0_3 = arith.constant 0 : index
    %c0_4 = arith.constant 0 : index
    %c0_5 = arith.constant 0 : index
    %6 = vector.load %arg2[%c0_3, %c0_4, %c0_5] : memref<3x64x64xf32, #tpu.memory_space<vmem>>, vector<1x64x64xf32>
    %7 = vector.shape_cast %6 : vector<1x64x64xf32> to vector<64x64xf32>
    %cst_6 = arith.constant dense<0.000000e+00> : vector<16x64xf32>
    %8 = tpu.matmul %5, %7, %cst_6 {dimension_numbers = #tpu.dot_dimension_numbers<[1], [0], [0], [1], [0, 0, 1, 1], [], []>} : vector<16x64xf32>, vector<64x64xf32>, vector<16x64xf32> -> vector<16x64xf32>
    %9 = arith.addf %2, %8 : vector<16x64xf32>
    %c1 = arith.constant 1 : index
    %c0_7 = arith.constant 0 : index
    %c0_8 = arith.constant 0 : index
    %10 = vector.load %arg2[%c1, %c0_7, %c0_8] : memref<3x64x64xf32, #tpu.memory_space<vmem>>, vector<1x64x64xf32>
    %11 = vector.shape_cast %10 : vector<1x64x64xf32> to vector<64x64xf32>
    %cst_9 = arith.constant dense<0.000000e+00> : vector<16x64xf32>
    %12 = tpu.matmul %1, %11, %cst_9 {dimension_numbers = #tpu.dot_dimension_numbers<[1], [0], [0], [1], [0, 0, 1, 1], [], []>} : vector<16x64xf32>, vector<64x64xf32>, vector<16x64xf32> -> vector<16x64xf32>
    %13 = arith.addf %9, %12 : vector<16x64xf32>
    %14 = vector.extract_strided_slice %1 {offsets = [1, 0], sizes = [15, 64], strides = [1, 1]} : vector<16x64xf32> to vector<15x64xf32>
    %cst_10 = arith.constant 0.000000e+00 : f32
    %15 = vector.broadcast %cst_10 : f32 to vector<1x64xf32>
    %16 = tpu.concatenate %14, %15 in 0 : vector<15x64xf32>, vector<1x64xf32> -> vector<16x64xf32>
    %c2 = arith.constant 2 : index
    %c0_11 = arith.constant 0 : index
    %c0_12 = arith.constant 0 : index
    %17 = vector.load %arg2[%c2, %c0_11, %c0_12] : memref<3x64x64xf32, #tpu.memory_space<vmem>>, vector<1x64x64xf32>
    %18 = vector.shape_cast %17 : vector<1x64x64xf32> to vector<64x64xf32>
    %cst_13 = arith.constant dense<0.000000e+00> : vector<16x64xf32>
    %19 = tpu.matmul %16, %18, %cst_13 {dimension_numbers = #tpu.dot_dimension_numbers<[1], [0], [0], [1], [0, 0, 1, 1], [], []>} : vector<16x64xf32>, vector<64x64xf32>, vector<16x64xf32> -> vector<16x64xf32>
    %20 = arith.addf %13, %19 : vector<16x64xf32>
    %c0_14 = arith.constant 0 : index
    %c0_15 = arith.constant 0 : index
    %21 = vector.load %arg3[%c0_14, %c0_15] : memref<1x64xf32, #tpu.memory_space<vmem>>, vector<1x64xf32>
    %22 = vector.broadcast %21 : vector<1x64xf32> to vector<16x64xf32>
    %23 = arith.addf %20, %22 : vector<16x64xf32>
    %cst_16 = arith.constant 0.000000e+00 : f32
    %24 = vector.broadcast %cst_16 : f32 to vector<16x64xf32>
    %25 = arith.maximumf %23, %24 : vector<16x64xf32>
    %cst_17 = arith.constant 1.000000e+00 : f32
    %26 = vector.broadcast %cst_17 : f32 to vector<16x64xf32>
    %27 = arith.mulf %25, %26 : vector<16x64xf32>
    %c0_18 = arith.constant 0 : index
    %c0_19 = arith.constant 0 : index
    %c0_20 = arith.constant 0 : index
    %28 = vector.load %arg4[%c0_18, %c0_19, %c0_20] : memref<1x16x64xf32, #tpu.memory_space<vmem>>, vector<1x16x64xf32>
    %29 = vector.shape_cast %28 : vector<1x16x64xf32> to vector<16x64xf32>
    %30 = vector.shape_cast %27 : vector<16x64xf32> to vector<1x16x64xf32>
    tpu.vector_store %arg4[%c0_18, %c0_19, %c0_20], %30 {strides = array<i32>} : memref<1x16x64xf32, #tpu.memory_space<vmem>>, vector<1x16x64xf32>,
    return
  }
  func.func @transform_0(%arg0: i32) -> (i32, i32, i32) {
    %c0_i32 = arith.constant 0 : i32
    %c0_i32_0 = arith.constant 0 : i32
    %c0_i32_1 = arith.constant 0 : i32
    return %arg0, %c0_i32, %c0_i32_0 : i32, i32, i32
  }
  func.func @transform_1(%arg0: i32) -> (i32, i32, i32) {
    %c0_i32 = arith.constant 0 : i32
    %c0_i32_0 = arith.constant 0 : i32
    %c0_i32_1 = arith.constant 0 : i32
    %c0_i32_2 = arith.constant 0 : i32
    return %c0_i32, %c0_i32_0, %c0_i32_1 : i32, i32, i32
  }
  func.func @transform_2(%arg0: i32) -> (i32, i32) {
    %c0_i32 = arith.constant 0 : i32
    %c0_i32_0 = arith.constant 0 : i32
    %c0_i32_1 = arith.constant 0 : i32
    return %c0_i32, %c0_i32_0 : i32, i32
  }
  func.func @transform_3(%arg0: i32) -> (i32, i32, i32) {
    %c0_i32 = arith.constant 0 : i32
    %c0_i32_0 = arith.constant 0 : i32
    %c0_i32_1 = arith.constant 0 : i32
    return %arg0, %c0_i32, %c0_i32_0 : i32, i32, i32
  }
}

</mosaic_0001>

<llo_original>
// kernel: tpu_custom_call.1
$region0: #{tpu_custom_call.1}
  #allocation0 [shape = 'u32[]', space=smem, size = 0x4, offset = 0x4, fixed_abs, tag = 'smem constant byte address 0x4 - core index']
  #allocation1 [shape = 'u32[72,128]{1,0:T(1,128)}', space=vmem, size = 0x9000, scoped, tag = 'internal scratch']
  %s0 = inlined_call_operand.hbm [shape: f32[2,16,64], index: 0, kind: input, shape index: {}]
  %s1 = inlined_call_operand.hbm [shape: f32[3,64,64], index: 1, kind: input, shape index: {}]
  %s2 = inlined_call_operand.vmem [shape: f32[1,64], index: 2, kind: input, shape index: {}]
  %s3 = inlined_call_operand.hbm [shape: f32[2,16,64], index: 3, kind: output, shape index: {}]
  %s4 = sld [smem:[#allocation0]]
  $region53: #{tpu_custom_call.1} parent=0
    _
  %s6 = ssub.s32 1, %s4
  %s7 = scalar_select 0, %s6, %s4
  $region1: #{tpu_custom_call.1} parent=0
    #allocation2 [shape = 'u8[16384]{0}', space=vmem, size = 0x4000, scoped, tag = 'input window, operand 0']
    #allocation3 [shape = 's32[2]{0}', space=sflag, size = 0x8, scoped, tag = 'scoped memory for tpu_custom_call.1']
    #allocation4 [shape = 's32[2]{0}', space=sflag, size = 0x8, scoped, tag = 'scoped memory for tpu_custom_call.1']
    #allocation5 [shape = 'u8[98304]{0}', space=vmem, size = 0x18000, scoped, tag = 'input window, operand 1, single buffered']
    #allocation6 [shape = 's32[1]{0}', space=sflag, size = 0x4, scoped, tag = 'scoped memory for tpu_custom_call.1']
    #allocation7 [shape = 'u8[16384]{0}', space=vmem, size = 0x4000, scoped, tag = 'output window, operand 0']
    %8 = vsyncpa [#allocation3], 0
    %s9 = scalar_lea.sflag [#allocation3], 1
    %10 = vsyncpa %s9, 0
    %11 = vsyncpa [#allocation6], 0
    %12 = vsyncpa [#allocation4], 0
    %s13 = scalar_lea.sflag [#allocation4], 1
    %14 = vsyncpa %s13, 0
    loop: start=0, step=1, limit=4
    $region2: #{tpu_custom_call.1} parent=1 // loop_pre_header
      _
    $region3: #{tpu_custom_call.1} parent=1 // loop_header
      %s16 = sphi 0, %s20
      %p17 = scmp.ge.s32.totalorder %s16, 4
      %s26 = sphi 0, %s28
      %s29 = sphi 0, %s26
      %s30 = sphi 0, %s29
      %s46 = sphi 0, %s30
      %s50 = sphi 0, %s50
      %s52 = sphi 0, %s50
      %s53 = sphi 0, %s52
      %s67 = sphi 0, %s53
      %s71 = sphi 0, %s71
      %s73 = sphi 0, %s71
      %s74 = sphi 0, %s73
      %s88 = sphi 0, %s74
      %s94 = sphi 0, %s96
      %s97 = sphi 0, %s94
      %s98 = sphi 0, %s97
      %s114 = sphi 0, %s98
    $region4: #{tpu_custom_call.1} parent=1 // loop_header_branch
      %19 = sbr.rel (%p17) target = $region8
    $region5: #{tpu_custom_call.1} parent=1 // loop_body
      %s21 = ssub.s32 %s16, 1
      %s22 = ssub.s32 %s16, 2
      %s23 = sadd.s32 %s16, 1
      %s24 = ssub.s32 %s16, %s23
      %p25 = scmp.eq.s32.totalorder %s24, 0
      %s27 = sadd.s32 %s26, 1
      %s28 = scalar_select %p25, %s26, %s27
      %p31 = pneg %p25
      %p32 = scmp.eq.s32.totalorder %s16, 1
      %p33 = por %p31, %p32
      %p34 = scmp.ne.s32.totalorder %s26, %s29
      %p35 = scmp.eq.s32.totalorder %s16, 0
      %p36 = por %p34, %p35
      %p37 = scmp.ne.s32.totalorder %s26, %s29
      %p38 = scmp.eq.s32.totalorder %s21, 1
      %p39 = por %p37, %p38
      %p40 = scmp.ne.s32.totalorder %s29, %s30
      %p41 = scmp.eq.s32.totalorder %s21, 0
      %p42 = por %p40, %p41
      %p43 = scmp.ne.s32.totalorder %s29, %s30
      %p44 = scmp.eq.s32.totalorder %s22, 1
      %p45 = por %p43, %p44
      %p47 = scmp.ne.s32.totalorder %s30, %s46
      %p48 = scmp.eq.s32.totalorder %s22, 0
      %p49 = por %p47, %p48
      %s51 = sadd.s32 %s50, 1
      %p54 = scmp.eq.s32.totalorder %s16, 1
      %p55 = scmp.ne.s32.totalorder %s50, %s52
      %p56 = scmp.eq.s32.totalorder %s16, 0
      %p57 = por %p55, %p56
      %p58 = scmp.ne.s32.totalorder %s50, %s52
      %p59 = scmp.eq.s32.totalorder %s21, 1
      %p60 = por %p58, %p59
      %p61 = scmp.ne.s32.totalorder %s52, %s53
      %p62 = scmp.eq.s32.totalorder %s21, 0
      %p63 = por %p61, %p62
      %p64 = scmp.ne.s32.totalorder %s52, %s53
      %p65 = scmp.eq.s32.totalorder %s22, 1
      %p66 = por %p64, %p65
      %p68 = scmp.ne.s32.totalorder %s53, %s67
      %p69 = scmp.eq.s32.totalorder %s22, 0
      %p70 = por %p68, %p69
      %s72 = sadd.s32 %s71, 1
      %p75 = scmp.eq.s32.totalorder %s16, 1
      %p76 = scmp.ne.s32.totalorder %s71, %s73
      %p77 = scmp.eq.s32.totalorder %s16, 0
      %p78 = por %p76, %p77
      %p79 = scmp.ne.s32.totalorder %s71, %s73
      %p80 = scmp.eq.s32.totalorder %s21, 1
      %p81 = por %p79, %p80
      %p82 = scmp.ne.s32.totalorder %s73, %s74
      %p83 = scmp.eq.s32.totalorder %s21, 0
      %p84 = por %p82, %p83
      %p85 = scmp.ne.s32.totalorder %s73, %s74
      %p86 = scmp.eq.s32.totalorder %s22, 1
      %p87 = por %p85, %p86
      %p89 = scmp.ne.s32.totalorder %s74, %s88
      %p90 = scmp.eq.s32.totalorder %s22, 0
      %p91 = por %p89, %p90
      %s92 = ssub.s32 %s16, %s23
      %p93 = scmp.eq.s32.totalorder %s92, 0
      %s95 = sadd.s32 %s94, 1
      %s96 = scalar_select %p93, %s94, %s95
      %p99 = pneg %p93
      %p100 = scmp.eq.s32.totalorder %s16, 1
      %p101 = por %p99, %p100
      %p102 = scmp.ne.s32.totalorder %s94, %s97
      %p103 = scmp.eq.s32.totalorder %s16, 0
      %p104 = por %p102, %p103
      %p105 = scmp.ne.s32.totalorder %s94, %s97
      %p106 = scmp.eq.s32.totalorder %s21, 1
      %p107 = por %p105, %p106
      %p108 = scmp.ne.s32.totalorder %s97, %s98
      %p109 = scmp.eq.s32.totalorder %s21, 0
      %p110 = por %p108, %p109
      %p111 = scmp.ne.s32.totalorder %s97, %s98
      %p112 = scmp.eq.s32.totalorder %s22, 1
      %p113 = por %p111, %p112
      %p115 = scmp.ne.s32.totalorder %s98, %s114
      %p116 = scmp.eq.s32.totalorder %s22, 0
      %p117 = por %p115, %p116
      %p118 = scmp.le.s32.totalorder 1, %s16
      %p119 = scmp.lt.s32.totalorder %s16, 3
      %p120 = pnand %p118, %p119
      %p121 = pneg %p120
      // Predicated region
      $region9: #{tpu_custom_call.1} parent=5 // pred_check
        _
      $region10: #{tpu_custom_call.1} parent=5 // pred_check_branch
        %123 = sbr.rel (%p120) target = $region12
      $region11: #{tpu_custom_call.1} parent=5 // pred_region
        %s124 = ssub.s32 %s16, 1
        // Predicated region
        $region13: #{tpu_custom_call.1} parent=11 // pred_check
          %p125 = pneg %p63
        $region14: #{tpu_custom_call.1} parent=11 // pred_check_branch
          %127 = sbr.rel (%p125) target = $region16
        $region15: #{tpu_custom_call.1} parent=11 // pred_region
          %129 = vsyncadd [#allocation6], 0
          %s130 = sshll.u32 %s1, 4
          %s131 = int_to_ptr.hbm [resolvable:$true] %s130
          %s132 = sshll.u32 [#allocation5], 4
          %s133 = int_to_ptr.vmem [resolvable:$true] %s132
          %138 = dma.hbm_to_vmem [thread:$0]  %s131, 3072, %s133, [#allocation6], 128, 128, 8
        $region16: #{tpu_custom_call.1} parent=11 // pred_fallthru
          _
        // Predicated region
        $region17: #{tpu_custom_call.1} parent=11 // pred_check
          %p139 = pneg %p84
        $region18: #{tpu_custom_call.1} parent=11 // pred_check_branch
          %141 = sbr.rel (%p139) target = $region20
        $region19: #{tpu_custom_call.1} parent=11 // pred_region
          _
        $region20: #{tpu_custom_call.1} parent=11 // pred_fallthru
          _
      $region12: #{tpu_custom_call.1} parent=5 // pred_fallthru
        _
      %p142 = scmp.lt.s32.totalorder %s16, 2
      // Predicated region
      $region21: #{tpu_custom_call.1} parent=5 // pred_check
        %p143 = pneg %p142
      $region22: #{tpu_custom_call.1} parent=5 // pred_check_branch
        %145 = sbr.rel (%p143) target = $region24
      $region23: #{tpu_custom_call.1} parent=5 // pred_region
        // Predicated region
        $region25: #{tpu_custom_call.1} parent=23 // pred_check
          %p146 = pneg %p36
        $region26: #{tpu_custom_call.1} parent=23 // pred_check_branch
          %148 = sbr.rel (%p146) target = $region28
        $region27: #{tpu_custom_call.1} parent=23 // pred_region
          %s149 = sand.u32 %s26, 1
          %s150 = scalar_lea.sflag [#allocation3], %s149
          %s151 = sand.u32 %s26, 1
          %s152 = smul.addr %s151, 16
          %s153 = scalar_lea.vmem [#allocation2], %s152
          %155 = vsyncadd %s150, 0
          %s156 = smul.addr %s16, 2
          %s157 = smul.addr %s156, 8
          %s158 = scalar_lea.hbm %s0, %s157
          %s159 = sshll.u32 %s158, 4
          %s160 = int_to_ptr.hbm [resolvable:$true] %s159
          %s161 = sshll.u32 %s153, 4
          %s162 = int_to_ptr.vmem [resolvable:$true] %s161
          %167 = dma.hbm_to_vmem [thread:$0]  %s160, 256, %s162, %s150, 128, 128, 8
        $region28: #{tpu_custom_call.1} parent=23 // pred_fallthru
          _
      $region24: #{tpu_custom_call.1} parent=5 // pred_fallthru
        _
      %p168 = scmp.le.s32.totalorder 1, %s16
      %p169 = scmp.lt.s32.totalorder %s16, 3
      %p170 = pnand %p168, %p169
      %p171 = pneg %p170
      // Predicated region
      $region29: #{tpu_custom_call.1} parent=5 // pred_check
        _
      $region30: #{tpu_custom_call.1} parent=5 // pred_check_branch
        %173 = sbr.rel (%p170) target = $region32
      $region31: #{tpu_custom_call.1} parent=5 // pred_region
        %s174 = ssub.s32 %s16, 1
        %s175 = sand.u32 %s29, 1
        %s176 = scalar_lea.sflag [#allocation3], %s175
        %s177 = sand.u32 %s29, 1
        %s178 = smul.addr %s177, 16
        %s179 = scalar_lea.vmem [#allocation2], %s178
        // Predicated region
        $region33: #{tpu_custom_call.1} parent=31 // pred_check
          %p180 = pneg %p42
        $region34: #{tpu_custom_call.1} parent=31 // pred_check_branch
          %182 = sbr.rel (%p180) target = $region36
        $region35: #{tpu_custom_call.1} parent=31 // pred_region
          %184 = dma.done %s176, 256
        $region36: #{tpu_custom_call.1} parent=31 // pred_fallthru
          _
        // Predicated region
        $region37: #{tpu_custom_call.1} parent=31 // pred_check
          %p185 = pneg %p63
        $region38: #{tpu_custom_call.1} parent=31 // pred_check_branch
          %187 = sbr.rel (%p185) target = $region40
        $region39: #{tpu_custom_call.1} parent=31 // pred_region
          %189 = dma.done [#allocation6], 3072
        $region40: #{tpu_custom_call.1} parent=31 // pred_fallthru
          _
        %s190 = sand.u32 %s29, 1
        %s191 = scalar_lea.sflag [#allocation3], %s190
        %s192 = sand.u32 %s29, 1
        %s193 = smul.addr %s192, 16
        %s194 = scalar_lea.vmem [#allocation2], %s193
        %p195 = pneg %p42
        %p196 = pneg %p39
        %p197 = pneg %p63
        %p198 = pneg %p60
        %p199 = pneg %p84
        %p200 = pneg %p81
        %p201 = pneg %p110
        %p202 = pneg %p107
        %s203 = sand.u32 %s97, 1
        %s204 = scalar_lea.sflag [#allocation4], %s203
        %s205 = sand.u32 %s97, 1
        %s206 = smul.addr %s205, 16
        %s207 = scalar_lea.vmem [#allocation7], %s206
        %v208 = vld [vmem:[%s179] sm:$0xff]
        %v209 = vld [vmem:[%s179 + $0x8] sm:$0xff]
        %vm212 = vcmask 1040384
        %v213 = vrot.slane %v208, 7
        %v214 = vrot.slane %v209, 7
        %v215 = vsel %vm212, %v213, %v214
        %v217 = vsel %vm212, 0.0, %v213
        %v218 = vld [vmem:[#allocation5] sm:$0xff]
        %v219 = vld [vmem:[#allocation5 + $0x8] sm:$0xff]
        %v220 = vld [vmem:[#allocation5 + $0x10] sm:$0xff]
        %v221 = vld [vmem:[#allocation5 + $0x18] sm:$0xff]
        %v222 = vld [vmem:[#allocation5 + $0x20] sm:$0xff]
        %v223 = vld [vmem:[#allocation5 + $0x28] sm:$0xff]
        %v224 = vld [vmem:[#allocation5 + $0x30] sm:$0xff]
        %v225 = vld [vmem:[#allocation5 + $0x38] sm:$0xff]
        %s226 = scalar_lea.vmem [#allocation5], 64
        %v227 = vld [vmem:[%s226] sm:$0xff]
        %v228 = vld [vmem:[%s226 + $0x8] sm:$0xff]
        %v229 = vld [vmem:[%s226 + $0x10] sm:$0xff]
        %v230 = vld [vmem:[%s226 + $0x18] sm:$0xff]
        %v231 = vld [vmem:[%s226 + $0x20] sm:$0xff]
        %v232 = vld [vmem:[%s226 + $0x28] sm:$0xff]
        %v233 = vld [vmem:[%s226 + $0x30] sm:$0xff]
        %v234 = vld [vmem:[%s226 + $0x38] sm:$0xff]
        %vm235 = vcmask 523264
        %v236 = vsel %vm235, %v208, 0
        %v238 = vsel %vm235, %v209, 0
        %240 = vmatpush.msra.mxu0 0.0
        %241 = vmatpush.msra.mxu0 0.0
        %242 = vmatpush.msra.mxu0 0.0
        %243 = vmatpush.msra.mxu0 0.0
        %244 = vmatpush.msra.mxu0 0.0
        %245 = vmatpush.msra.mxu0 0.0
        %246 = vmatpush.msra.mxu0 0.0
        %247 = vmatpush.msra.mxu0 0.0
        %248 = vmatpush.msra.mxu0 %v234
        %249 = vmatpush.msra.mxu0 %v233
        %250 = vmatpush.msra.mxu0 %v232
        %251 = vmatpush.msra.mxu0 %v231
        %252 = vmatpush.msra.mxu0 %v230
        %253 = vmatpush.msra.mxu0 %v229
        %254 = vmatpush.msra.mxu0 %v228
        %255 = vmatpush.msra.mxu0 %v227
        %256 = vmatmul.f32.gmra.mxu0 %v236
        %v257 = vpop.f32.mrf.mxu0
        %v258 = vadd.f32 0.0, %v257
        %259 = vmatmul.f32.gmra.mxu0 %v238
        %v260 = vpop.f32.mrf.mxu0
        %v261 = vadd.f32 0.0, %v260
        %262 = vdwg.mxu0
        %v264 = vsel %vm235, %v217, 0
        %v266 = vsel %vm235, %v215, 0
        %268 = vmatpush.msra.mxu0 0.0
        %269 = vmatpush.msra.mxu0 0.0
        %270 = vmatpush.msra.mxu0 0.0
        %271 = vmatpush.msra.mxu0 0.0
        %272 = vmatpush.msra.mxu0 0.0
        %273 = vmatpush.msra.mxu0 0.0
        %274 = vmatpush.msra.mxu0 0.0
        %275 = vmatpush.msra.mxu0 0.0
        %276 = vmatpush.msra.mxu0 %v225
        %277 = vmatpush.msra.mxu0 %v224
        %278 = vmatpush.msra.mxu0 %v223
        %279 = vmatpush.msra.mxu0 %v222
        %280 = vmatpush.msra.mxu0 %v221
        %281 = vmatpush.msra.mxu0 %v220
        %282 = vmatpush.msra.mxu0 %v219
        %283 = vmatpush.msra.mxu0 %v218
        %284 = vmatmul.f32.gmra.mxu0 %v264
        %v285 = vpop.f32.mrf.mxu0
        %v286 = vadd.f32 %v258, %v285
        %287 = vmatmul.f32.gmra.mxu0 %v266
        %v288 = vpop.f32.mrf.mxu0
        %v289 = vadd.f32 %v261, %v288
        %290 = vdwg.mxu0
        %vm291 = vcmask 1046528
        %v292 = vrot.slane %v208, 1
        %v293 = vrot.slane %v209, 1
        %v294 = vsel %vm291, %v292, %v293
        %v296 = vsel %vm291, %v293, 0.0
        %s297 = scalar_lea.vmem [#allocation5], 128
        %v298 = vld [vmem:[%s297] sm:$0xff]
        %v299 = vld [vmem:[%s297 + $0x8] sm:$0xff]
        %v300 = vld [vmem:[%s297 + $0x10] sm:$0xff]
        %v301 = vld [vmem:[%s297 + $0x18] sm:$0xff]
        %v302 = vld [vmem:[%s297 + $0x20] sm:$0xff]
        %v303 = vld [vmem:[%s297 + $0x28] sm:$0xff]
        %v304 = vld [vmem:[%s297 + $0x30] sm:$0xff]
        %v305 = vld [vmem:[%s297 + $0x38] sm:$0xff]
        %v306 = vsel %vm235, %v294, 0
        %v309 = vsel %vm235, %v296, 0
        %311 = vmatpush.msra.mxu0 0.0
        %312 = vmatpush.msra.mxu0 0.0
        %313 = vmatpush.msra.mxu0 0.0
        %314 = vmatpush.msra.mxu0 0.0
        %315 = vmatpush.msra.mxu0 0.0
        %316 = vmatpush.msra.mxu0 0.0
        %317 = vmatpush.msra.mxu0 0.0
        %318 = vmatpush.msra.mxu0 0.0
        %319 = vmatpush.msra.mxu0 %v305
        %320 = vmatpush.msra.mxu0 %v304
        %321 = vmatpush.msra.mxu0 %v303
        %322 = vmatpush.msra.mxu0 %v302
        %323 = vmatpush.msra.mxu0 %v301
        %324 = vmatpush.msra.mxu0 %v300
        %325 = vmatpush.msra.mxu0 %v299
        %326 = vmatpush.msra.mxu0 %v298
        %327 = vmatmul.f32.gmra.mxu0 %v306
        %v328 = vpop.f32.mrf.mxu0
        %v329 = vadd.f32 0.0, %v328
        %330 = vmatmul.f32.gmra.mxu0 %v309
        %v331 = vpop.f32.mrf.mxu0
        %v332 = vadd.f32 0.0, %v331
        %333 = vdwg.mxu0
        %v334 = vadd.f32 %v286, %v329
        %v335 = vadd.f32 %v289, %v332
        %v336 = vld [vmem:[%s2] sm:$0x1]
        %v338 = vperm.slane %v336, 0
        %v340 = vadd.f32 %v334, %v338
        %v341 = vadd.f32 %v335, %v338
        %v342 = vmax.f32 %v340, 0.0
        %v343 = vmax.f32 %v341, 0.0
        %344 = vst.msk [vmem:[%s207] sm:$0xff] %vm235, %v342
        %345 = vst.msk [vmem:[%s207 + $0x8] sm:$0xff] %vm235, %v343
        %s346 = sand.u32 %s97, 1
        %s347 = scalar_lea.sflag [#allocation4], %s346
        %s348 = sand.u32 %s97, 1
        %s349 = smul.addr %s348, 16
        %s350 = scalar_lea.vmem [#allocation7], %s349
        // Predicated region
        $region41: #{tpu_custom_call.1} parent=31 // pred_check
          %p351 = pneg %p107
        $region42: #{tpu_custom_call.1} parent=31 // pred_check_branch
          %353 = sbr.rel (%p351) target = $region44
        $region43: #{tpu_custom_call.1} parent=31 // pred_region
          %355 = vsyncadd %s347, 0
          %s356 = smul.addr %s21, 2
          %s357 = smul.addr %s356, 8
          %s358 = scalar_lea.hbm %s3, %s357
          %s359 = sshll.u32 %s350, 4
          %s360 = int_to_ptr.vmem [resolvable:$true] %s359
          %s361 = sshll.u32 %s358, 4
          %s362 = int_to_ptr.hbm [resolvable:$true] %s361
          %367 = dma.vmem_to_hbm [thread:$0]  %s360, 256, %s362, %s347, 128, 128, 8
        $region44: #{tpu_custom_call.1} parent=31 // pred_fallthru
          _
      $region32: #{tpu_custom_call.1} parent=5 // pred_fallthru
        _
      %p368 = scmp.le.s32.totalorder 2, %s16
      // Predicated region
      $region45: #{tpu_custom_call.1} parent=5 // pred_check
        %p369 = pneg %p368
      $region46: #{tpu_custom_call.1} parent=5 // pred_check_branch
        %371 = sbr.rel (%p369) target = $region48
      $region47: #{tpu_custom_call.1} parent=5 // pred_region
        %s372 = ssub.s32 %s16, 2
        // Predicated region
        $region49: #{tpu_custom_call.1} parent=47 // pred_check
          %p373 = pneg %p113
        $region50: #{tpu_custom_call.1} parent=47 // pred_check_branch
          %375 = sbr.rel (%p373) target = $region52
        $region51: #{tpu_custom_call.1} parent=47 // pred_region
          %s376 = sand.u32 %s98, 1
          %s377 = scalar_lea.sflag [#allocation4], %s376
          %s378 = sand.u32 %s98, 1
          %s379 = smul.addr %s378, 16
          %s380 = scalar_lea.vmem [#allocation7], %s379
          %382 = dma.done %s377, 256
        $region52: #{tpu_custom_call.1} parent=47 // pred_fallthru
          _
      $region48: #{tpu_custom_call.1} parent=5 // pred_fallthru
        _
    $region6: #{tpu_custom_call.1} parent=1 // loop_footer
      %s20 = sadd.s32 1, %s16
    $region7: #{tpu_custom_call.1} parent=1 // loop_footer_branch
      %15 = sbr.rel target = $region3
    $region8: #{tpu_custom_call.1} parent=1 // loop_exit
      _
    %383 = vsyncpa [#allocation3], 1
    %s384 = scalar_lea.sflag [#allocation3], 1
    %385 = vsyncpa %s384, 1
    %386 = vsyncpa [#allocation6], 1
    %387 = vsyncpa [#allocation4], 1
    %s388 = scalar_lea.sflag [#allocation4], 1
    %389 = vsyncpa %s388, 1

</llo_original>
